<compile_context>
chip_gen: v5e
topology: v5e:2x2
jax: 0.10.0
libtpu: 0.0.40
codegen_flags: <defaults>
</compile_context>

<pallas_src>
import functools

import jax
import jax.numpy as jnp
from jax.experimental import pallas as pl
from jax.experimental.pallas import tpu as pltpu


def _round_up(n, m):
    return ((n + m - 1) // m) * m


def _vmem_budget_bytes():
    """Conservative per-core VMEM budget: ~80% on 64 MiB chips, ~85% on 128 MiB."""
    phys = 64 * 1024 * 1024
    try:
        info = pltpu.get_tpu_info()
        phys = int(getattr(info, "vmem_capacity_bytes", phys) or phys)
    except Exception:
        pass
    frac = 0.80 if phys <= 64 * 1024 * 1024 else 0.85
    return int(phys * frac)


def _owm_fc_kernel(x_ref, w1_ref, w2_ref, h2_ref, h1_ref, *, no_actfun, compute_dtype):
    # x_ref : [TB, num_in]       (VMEM tile, pipelined over batch)
    # w1_ref: [num_in, nh_pad]   (resident, MXU-native [K, N] layout)
    # w2_ref: [nh_pad, nc_pad]   (resident, MXU-native [K, N] layout)
    # h2_ref: [TB, nc_pad]       (logits, lane-dense)
    # h1_ref: [TB, nh_pad]       (layer-1 pre-activation, lane-dense)
    x = x_ref[...]
    if compute_dtype is not None and x.dtype != compute_dtype:
        x = x.astype(compute_dtype)

    # x @ W1.T  ==  x @ w1_t   (plain (1,0) contraction -> no in-kernel relayout)
    h1 = jnp.dot(x, w1_ref[...], preferred_element_type=jnp.float32)
    h1_ref[...] = h1.astype(h1_ref.dtype)

    act = h1 if no_actfun else jnp.maximum(h1, 0.0)

    # relu(h1) @ W2.T  ==  act @ w2_t
    h2 = jnp.dot(act.astype(w2_ref.dtype), w2_ref[...],
                 preferred_element_type=jnp.float32)
    h2_ref[...] = h2.astype(h2_ref.dtype)


def owm_fc_forward(x, w1, w2, *, no_actfun=False, compute_dtype=None, max_tile_b=1024):
    """Forward pass of owm_fc.

    Args:
      x : [B, num_in]
      w1: [num_hidden, num_in]     (PyTorch Linear weight layout)
      w2: [num_classes, num_hidden]
      no_actfun: if True, skip the ReLU between the two layers.
      compute_dtype: optional MXU dtype (e.g. jnp.bfloat16); weights are
        pre-cast in the wrapper, accumulation stays f32.  None -> exact f32 path.
      max_tile_b: cap on the batch tile (rows per grid step); auto-shrunk to VMEM.

    Returns:
      (hidden_2 [B, num_classes], hidden_1 [B, num_hidden])
    """
    B, num_in = x.shape
    num_hidden, w1_in = w1.shape
    num_classes, w2_in = w2.shape
    assert w1_in == num_in and w2_in == num_hidden
    out_dtype = x.dtype

    # Sublane multiple for the batch dim: 8 for 4-byte dtypes, 16 for bf16, 32 for i8.
    sub = max(8, 32 // jnp.dtype(x.dtype).itemsize)

    # Lane-dense hidden / class dims (multiple of 128).
    nh_pad = _round_up(num_hidden, 128)
    nc_pad = _round_up(num_classes, 128)

    # ---- weights: pad + transpose ONCE to MXU-native [K, N] layout ----
    w1_t = w1
    if nh_pad != num_hidden:
        w1_t = jnp.pad(w1_t, ((0, nh_pad - num_hidden), (0, 0)))
    w1_t = w1_t.T                                       # [num_in, nh_pad]
    w2_t = w2
    if nc_pad != num_classes or nh_pad != num_hidden:
        w2_t = jnp.pad(w2_t, ((0, nc_pad - num_classes), (0, nh_pad - num_hidden)))
    w2_t = w2_t.T                                       # [nh_pad, nc_pad]
    if compute_dtype is not None:
        w1_t = w1_t.astype(compute_dtype)
        w2_t = w2_t.astype(compute_dtype)

    # ---- batch: pad only to the sublane multiple (usually a no-op) ----
    b_pad = _round_up(B, sub)
    x_in = x if b_pad == B else jnp.pad(x, ((0, b_pad - B), (0, 0)))

    # ---- pick the batch tile tb to fit the VMEM budget ----
    budget = _vmem_budget_bytes()
    x_item = jnp.dtype(x_in.dtype).itemsize
    w_item = jnp.dtype(w1_t.dtype).itemsize
    o_item = jnp.dtype(out_dtype).itemsize
    # Worst case: double-buffered weights (fallback path) + double-buffered tiles.
    weight_bytes = 2 * (num_in * nh_pad + nh_pad * nc_pad) * w_item

    def _resident(tb):
        return (weight_bytes
                + 2 * tb * num_in * x_item
                + 2 * tb * (nh_pad + nc_pad) * o_item)

    tb = _round_up(min(b_pad, max_tile_b), sub)
    while tb > sub and _resident(tb) > budget:
        tb = max(sub, (tb // 2) // sub * sub)
    if _resident(tb) > budget:
        raise ValueError(
            f"owm_fc_forward: resident weights ({weight_bytes / 2**20:.1f} MiB incl. "
            f"double-buffering) exceed the VMEM budget ({budget / 2**20:.1f} MiB); "
            "the weights would need to be tiled over a K/N grid.")

    grid = (pl.cdiv(b_pad, tb),)

    kernel = functools.partial(
        _owm_fc_kernel, no_actfun=no_actfun, compute_dtype=compute_dtype)

    cost = pl.CostEstimate(
        flops=2 * b_pad * num_in * nh_pad + 2 * b_pad * nh_pad * nc_pad,
        transcendentals=0,
        bytes_accessed=(b_pad * num_in * x_item
                        + (num_in * nh_pad + nh_pad * nc_pad) * w_item
                        + b_pad * (nh_pad + nc_pad) * o_item),
    )

    def _build(single_buffer_weights):
        w_kw = dict(pipeline_mode=pl.Buffered(1)) if single_buffer_weights else {}
        return pl.pallas_call(
            kernel,
            out_shape=(
                jax.ShapeDtypeStruct((b_pad, nc_pad), out_dtype),   # h2 (lane-dense)
                jax.ShapeDtypeStruct((b_pad, nh_pad), out_dtype),   # h1 (lane-dense)
            ),
            grid=grid,
            in_specs=[
                pl.BlockSpec((tb, num_in), lambda i: (i, 0)),               # x tile
                pl.BlockSpec((num_in, nh_pad), lambda i: (0, 0), **w_kw),   # W1^T resident
                pl.BlockSpec((nh_pad, nc_pad), lambda i: (0, 0), **w_kw),   # W2^T resident
            ],
            out_specs=(
                pl.BlockSpec((tb, nc_pad), lambda i: (i, 0)),
                pl.BlockSpec((tb, nh_pad), lambda i: (i, 0)),
            ),
            compiler_params=pltpu.CompilerParams(
                # batch tiles are independent; split across TCs where supported
                dimension_semantics=("parallel",),
                vmem_limit_bytes=int(budget),
            ),
            cost_estimate=cost,
        )

    try:
        h2_full, h1_full = _build(True)(x_in, w1_t, w2_t)
    except Exception:
        # Some Pallas versions reject Buffered(1) on top-level pallas_call specs;
        # fall back to default (double) buffering for the constant weights.
        h2_full, h1_full = _build(False)(x_in, w1_t, w2_t)

    h2 = h2_full if (b_pad == B and nc_pad == num_classes) else h2_full[:B, :num_classes]
    h1 = h1_full if (b_pad == B and nh_pad == num_hidden) else h1_full[:B, :num_hidden]
    return h2, h1


def xavier_uniform_relu(key, out_features, in_features, dtype=jnp.float32):
    """Matches nn.init.xavier_uniform_(..., gain=calculate_gain('relu'))."""
    gain = jnp.sqrt(2.0)
    bound = gain * jnp.sqrt(6.0 / (in_features + out_features))
    return jax.random.uniform(
        key, (out_features, in_features), dtype=dtype, minval=-bound, maxval=bound)


def reference_forward(x, w1, w2, *, no_actfun=False):
    h1 = x @ w1.T
    act = h1 if no_actfun else jnp.maximum(h1, 0.0)
    h2 = act @ w2.T
    return h2, h1


if __name__ == "__main__":
    # Small shapes consistent with the module (num_in would be 784 for MNIST).
    batch = 8
    num_in = 256
    num_hidden = 128
    num_classes = 16

    key = jax.random.PRNGKey(0)
    kx, kw1, kw2 = jax.random.split(key, 3)

    x = jax.random.normal(kx, (batch, num_in), dtype=jnp.float32)
    # layer_1.W.weight : [num_hidden, num_in], layer_2.W.weight : [num_classes, num_hidden]
    w1 = xavier_uniform_relu(kw1, num_hidden, num_in)
    w2 = xavier_uniform_relu(kw2, num_classes, num_hidden)
    # NOTE: OWM_FC_block.P (identity projection) is never used in forward(), so it is omitted.

    h2, h1 = owm_fc_forward(x, w1, w2, no_actfun=False)
    jax.block_until_ready((h2, h1))

    h2_ref, h1_ref = reference_forward(x, w1, w2, no_actfun=False)
    assert h1.shape == h1_ref.shape and h2.shape == h2_ref.shape
    assert jnp.allclose(h1, h1_ref, atol=1e-4, rtol=1e-4)
    assert jnp.allclose(h2, h2_ref, atol=1e-4, rtol=1e-4)

    # Also exercise the no_actfun path.
    h2n, h1n = owm_fc_forward(x, w1, w2, no_actfun=True)
    jax.block_until_ready((h2n, h1n))
    h2n_ref, h1n_ref = reference_forward(x, w1, w2, no_actfun=True)
    assert jnp.allclose(h1n, h1n_ref, atol=1e-4, rtol=1e-4)
    assert jnp.allclose(h2n, h2n_ref, atol=1e-4, rtol=1e-4)

    print("KERNEL_OK")
</pallas_src>

<mosaic_0001>
module attributes {stable_mosaic.version = 11 : i64} {
  func.func @_owm_fc_kernel(%arg0: i32, %arg1: memref<8x256xf32, #tpu.memory_space<vmem>>, %arg2: memref<256x128xf32, #tpu.memory_space<vmem>>, %arg3: memref<128x128xf32, #tpu.memory_space<vmem>>, %arg4: memref<8x128xf32, #tpu.memory_space<vmem>>, %arg5: memref<8x128xf32, #tpu.memory_space<vmem>>) attributes {dimension_semantics = [#tpu.dimension_semantics<parallel>], iteration_bounds = array<i64: 1>, scalar_prefetch = 0 : i64, scratch_operands = 0 : i64, tpu.core_type = #tpu.core_type<tc>, window_params = [{transform_indices = @transform_0, window_bounds = array<i64: 8, 256>}, {pipeline_mode = #tpu.pipeline_mode<synchronous>, transform_indices = @transform_1, window_bounds = array<i64: 256, 128>}, {pipeline_mode = #tpu.pipeline_mode<synchronous>, transform_indices = @transform_2, window_bounds = array<i64: 128, 128>}, {transform_indices = @transform_3, window_bounds = array<i64: 8, 128>}, {transform_indices = @transform_4, window_bounds = array<i64: 8, 128>}]} {
    %c0 = arith.constant 0 : index
    %c0_0 = arith.constant 0 : index
    %0 = vector.load %arg1[%c0, %c0_0] : memref<8x256xf32, #tpu.memory_space<vmem>>, vector<8x256xf32>
    %c0_1 = arith.constant 0 : index
    %c0_2 = arith.constant 0 : index
    %1 = vector.load %arg2[%c0_1, %c0_2] : memref<256x128xf32, #tpu.memory_space<vmem>>, vector<256x128xf32>
    %cst = arith.constant dense<0.000000e+00> : vector<8x128xf32>
    %2 = tpu.matmul %0, %1, %cst {dimension_numbers = #tpu.dot_dimension_numbers<[1], [0], [0], [1], [0, 0, 1, 1], [], []>} : vector<8x256xf32>, vector<256x128xf32>, vector<8x128xf32> -> vector<8x128xf32>
    %c0_3 = arith.constant 0 : index
    %c0_4 = arith.constant 0 : index
    %3 = vector.load %arg5[%c0_3, %c0_4] : memref<8x128xf32, #tpu.memory_space<vmem>>, vector<8x128xf32>
    tpu.vector_store %arg5[%c0_3, %c0_4], %2 {strides = array<i32>} : memref<8x128xf32, #tpu.memory_space<vmem>>, vector<8x128xf32>,
    %cst_5 = arith.constant 0.000000e+00 : f32
    %4 = vector.broadcast %cst_5 : f32 to vector<8x128xf32>
    %5 = arith.maximumf %2, %4 : vector<8x128xf32>
    %c0_6 = arith.constant 0 : index
    %c0_7 = arith.constant 0 : index
    %6 = vector.load %arg3[%c0_6, %c0_7] : memref<128x128xf32, #tpu.memory_space<vmem>>, vector<128x128xf32>
    %cst_8 = arith.constant dense<0.000000e+00> : vector<8x128xf32>
    %7 = tpu.matmul %5, %6, %cst_8 {dimension_numbers = #tpu.dot_dimension_numbers<[1], [0], [0], [1], [0, 0, 1, 1], [], []>} : vector<8x128xf32>, vector<128x128xf32>, vector<8x128xf32> -> vector<8x128xf32>
    %c0_9 = arith.constant 0 : index
    %c0_10 = arith.constant 0 : index
    %8 = vector.load %arg4[%c0_9, %c0_10] : memref<8x128xf32, #tpu.memory_space<vmem>>, vector<8x128xf32>
    tpu.vector_store %arg4[%c0_9, %c0_10], %7 {strides = array<i32>} : memref<8x128xf32, #tpu.memory_space<vmem>>, vector<8x128xf32>,
    return
  }
  func.func @transform_0(%arg0: i32) -> (i32, i32) {
    %c0_i32 = arith.constant 0 : i32
    %c0_i32_0 = arith.constant 0 : i32
    return %arg0, %c0_i32 : i32, i32
  }
  func.func @transform_1(%arg0: i32) -> (i32, i32) {
    %c0_i32 = arith.constant 0 : i32
    %c0_i32_0 = arith.constant 0 : i32
    %c0_i32_1 = arith.constant 0 : i32
    return %c0_i32, %c0_i32_0 : i32, i32
  }
  func.func @transform_2(%arg0: i32) -> (i32, i32) {
    %c0_i32 = arith.constant 0 : i32
    %c0_i32_0 = arith.constant 0 : i32
    %c0_i32_1 = arith.constant 0 : i32
    return %c0_i32, %c0_i32_0 : i32, i32
  }
  func.func @transform_3(%arg0: i32) -> (i32, i32) {
    %c0_i32 = arith.constant 0 : i32
    %c0_i32_0 = arith.constant 0 : i32
    return %arg0, %c0_i32 : i32, i32
  }
  func.func @transform_4(%arg0: i32) -> (i32, i32) {
    %c0_i32 = arith.constant 0 : i32
    %c0_i32_0 = arith.constant 0 : i32
    return %arg0, %c0_i32 : i32, i32
  }
}

module attributes {stable_mosaic.version = 11 : i64} {
  func.func @_owm_fc_kernel(%arg0: i32, %arg1: memref<8x256xf32, #tpu.memory_space<vmem>>, %arg2: memref<256x128xf32, #tpu.memory_space<vmem>>, %arg3: memref<128x128xf32, #tpu.memory_space<vmem>>, %arg4: memref<8x128xf32, #tpu.memory_space<vmem>>, %arg5: memref<8x128xf32, #tpu.memory_space<vmem>>) attributes {dimension_semantics = [#tpu.dimension_semantics<parallel>], iteration_bounds = array<i64: 1>, scalar_prefetch = 0 : i64, scratch_operands = 0 : i64, tpu.core_type = #tpu.core_type<tc>, window_params = [{transform_indices = @transform_0, window_bounds = array<i64: 8, 256>}, {pipeline_mode = #tpu.pipeline_mode<synchronous>, transform_indices = @transform_1, window_bounds = array<i64: 256, 128>}, {pipeline_mode = #tpu.pipeline_mode<synchronous>, transform_indices = @transform_2, window_bounds = array<i64: 128, 128>}, {transform_indices = @transform_3, window_bounds = array<i64: 8, 128>}, {transform_indices = @transform_4, window_bounds = array<i64: 8, 128>}]} {
    %c0 = arith.constant 0 : index
    %c0_0 = arith.constant 0 : index
    %0 = vector.load %arg1[%c0, %c0_0] : memref<8x256xf32, #tpu.memory_space<vmem>>, vector<8x256xf32>
    %c0_1 = arith.constant 0 : index
    %c0_2 = arith.constant 0 : index
    %1 = vector.load %arg2[%c0_1, %c0_2] : memref<256x128xf32, #tpu.memory_space<vmem>>, vector<256x128xf32>
    %cst = arith.constant dense<0.000000e+00> : vector<8x128xf32>
    %2 = tpu.matmul %0, %1, %cst {dimension_numbers = #tpu.dot_dimension_numbers<[1], [0], [0], [1], [0, 0, 1, 1], [], []>} : vector<8x256xf32>, vector<256x128xf32>, vector<8x128xf32> -> vector<8x128xf32>
    %c0_3 = arith.constant 0 : index
    %c0_4 = arith.constant 0 : index
    %3 = vector.load %arg5[%c0_3, %c0_4] : memref<8x128xf32, #tpu.memory_space<vmem>>, vector<8x128xf32>
    tpu.vector_store %arg5[%c0_3, %c0_4], %2 {strides = array<i32>} : memref<8x128xf32, #tpu.memory_space<vmem>>, vector<8x128xf32>,
    %cst_5 = arith.constant 0.000000e+00 : f32
    %4 = vector.broadcast %cst_5 : f32 to vector<8x128xf32>
    %5 = arith.maximumf %2, %4 : vector<8x128xf32>
    %c0_6 = arith.constant 0 : index
    %c0_7 = arith.constant 0 : index
    %6 = vector.load %arg3[%c0_6, %c0_7] : memref<128x128xf32, #tpu.memory_space<vmem>>, vector<128x128xf32>
    %cst_8 = arith.constant dense<0.000000e+00> : vector<8x128xf32>
    %7 = tpu.matmul %5, %6, %cst_8 {dimension_numbers = #tpu.dot_dimension_numbers<[1], [0], [0], [1], [0, 0, 1, 1], [], []>} : vector<8x128xf32>, vector<128x128xf32>, vector<8x128xf32> -> vector<8x128xf32>
    %c0_9 = arith.constant 0 : index
    %c0_10 = arith.constant 0 : index
    %8 = vector.load %arg4[%c0_9, %c0_10] : memref<8x128xf32, #tpu.memory_space<vmem>>, vector<8x128xf32>
    tpu.vector_store %arg4[%c0_9, %c0_10], %7 {strides = array<i32>} : memref<8x128xf32, #tpu.memory_space<vmem>>, vector<8x128xf32>,
    return
  }
  func.func @transform_0(%arg0: i32) -> (i32, i32) {
    %c0_i32 = arith.constant 0 : i32
    %c0_i32_0 = arith.constant 0 : i32
    return %arg0, %c0_i32 : i32, i32
  }
  func.func @transform_1(%arg0: i32) -> (i32, i32) {
    %c0_i32 = arith.constant 0 : i32
    %c0_i32_0 = arith.constant 0 : i32
    %c0_i32_1 = arith.constant 0 : i32
    return %c0_i32, %c0_i32_0 : i32, i32
  }
  func.func @transform_2(%arg0: i32) -> (i32, i32) {
    %c0_i32 = arith.constant 0 : i32
    %c0_i32_0 = arith.constant 0 : i32
    %c0_i32_1 = arith.constant 0 : i32
    return %c0_i32, %c0_i32_0 : i32, i32
  }
  func.func @transform_3(%arg0: i32) -> (i32, i32) {
    %c0_i32 = arith.constant 0 : i32
    %c0_i32_0 = arith.constant 0 : i32
    return %arg0, %c0_i32 : i32, i32
  }
  func.func @transform_4(%arg0: i32) -> (i32, i32) {
    %c0_i32 = arith.constant 0 : i32
    %c0_i32_0 = arith.constant 0 : i32
    return %arg0, %c0_i32 : i32, i32
  }
}

</mosaic_0001>

<llo_original>
// kernel: tpu_custom_call.1
$region0: #{tpu_custom_call.1}
  #allocation0 [shape = 'u32[]', space=smem, size = 0x4, offset = 0x4, fixed_abs, tag = 'smem constant byte address 0x4 - core index']
  #allocation1 [shape = 'u32[72,128]{1,0:T(1,128)}', space=vmem, size = 0x9000, scoped, tag = 'internal scratch']
  %s0 = inlined_call_operand.hbm [shape: f32[8,256], index: 0, kind: input, shape index: {}]
  %s1 = inlined_call_operand.hbm [shape: f32[256,128], index: 1, kind: input, shape index: {}]
  %s2 = inlined_call_operand.hbm [shape: f32[128,128], index: 2, kind: input, shape index: {}]
  %s3 = inlined_call_operand.hbm [shape: f32[8,128], index: 3, kind: output, shape index: {0}]
  %s4 = inlined_call_operand.hbm [shape: f32[8,128], index: 4, kind: output, shape index: {1}]
  %5 = xla_tuple %s3, %s4
  %s6 = sld [smem:[#allocation0]]
  $region42: #{tpu_custom_call.1} parent=0
    _
  %s8 = ssub.s32 1, %s6
  %s9 = scalar_select 0, %s8, %s6
  $region1: #{tpu_custom_call.1} parent=0
    #allocation2 [shape = 'u8[8192]{0}', space=vmem, size = 0x2000, scoped, tag = 'input window, operand 0, single buffered']
    #allocation3 [shape = 's32[1]{0}', space=sflag, size = 0x4, scoped, tag = 'scoped memory for tpu_custom_call.1']
    #allocation4 [shape = 's32[1]{0}', space=sflag, size = 0x4, scoped, tag = 'scoped memory for tpu_custom_call.1']
    #allocation5 [shape = 'u8[131072]{0}', space=vmem, size = 0x20000, scoped, tag = 'input window, operand 1, single buffered']
    #allocation6 [shape = 's32[1]{0}', space=sflag, size = 0x4, scoped, tag = 'scoped memory for tpu_custom_call.1']
    #allocation7 [shape = 'u8[65536]{0}', space=vmem, size = 0x10000, scoped, tag = 'input window, operand 2, single buffered']
    #allocation8 [shape = 'u8[4096]{0}', space=vmem, size = 0x1000, scoped, tag = 'output window, operand 0, single buffered']
    #allocation9 [shape = 'u8[4096]{0}', space=vmem, size = 0x1000, scoped, tag = 'output window, operand 1, single buffered']
    #allocation10 [shape = 's32[1]{0}', space=sflag, size = 0x4, scoped, tag = 'scoped memory for tpu_custom_call.1']
    %10 = vsyncpa [#allocation3], 0
    %11 = vsyncpa [#allocation6], 0
    %12 = vsyncpa [#allocation4], 0
    %13 = vsyncpa [#allocation10], 0
    // Predicated region
    $region2: #{tpu_custom_call.1} parent=1 // pred_check
      _
    $region3: #{tpu_custom_call.1} parent=1 // pred_check_branch
      %15 = sbr.rel (0) target = $region5
    $region4: #{tpu_custom_call.1} parent=1 // pred_region
      %17 = vsyncadd [#allocation3], 0
      %s19 = sshll.u32 %s0, 4
      %s20 = int_to_ptr.hbm [resolvable:$true] %s19
      %s21 = sshll.u32 [#allocation2], 4
      %s22 = int_to_ptr.vmem [resolvable:$true] %s21
      %24 = dma.hbm_to_vmem [thread:$0]  %s20, 256, %s22, [#allocation3]
    $region5: #{tpu_custom_call.1} parent=1 // pred_fallthru
      _
    // Predicated region
    $region6: #{tpu_custom_call.1} parent=1 // pred_check
      _
    $region7: #{tpu_custom_call.1} parent=1 // pred_check_branch
      %26 = sbr.rel (0) target = $region9
    $region8: #{tpu_custom_call.1} parent=1 // pred_region
      %28 = vsyncadd [#allocation6], 0
      %s29 = sshll.u32 %s1, 4
      %s30 = int_to_ptr.hbm [resolvable:$true] %s29
      %s31 = sshll.u32 [#allocation5], 4
      %s32 = int_to_ptr.vmem [resolvable:$true] %s31
      %37 = dma.hbm_to_vmem [thread:$0]  %s30, 4096, %s32, [#allocation6], 128, 128, 8
    $region9: #{tpu_custom_call.1} parent=1 // pred_fallthru
      _
    // Predicated region
    $region10: #{tpu_custom_call.1} parent=1 // pred_check
      _
    $region11: #{tpu_custom_call.1} parent=1 // pred_check_branch
      %39 = sbr.rel (0) target = $region13
    $region12: #{tpu_custom_call.1} parent=1 // pred_region
      %41 = vsyncadd [#allocation6], 0
      %s42 = sshll.u32 %s2, 4
      %s43 = int_to_ptr.hbm [resolvable:$true] %s42
      %s44 = sshll.u32 [#allocation7], 4
      %s45 = int_to_ptr.vmem [resolvable:$true] %s44
      %50 = dma.hbm_to_vmem [thread:$0]  %s43, 2048, %s45, [#allocation6], 128, 128, 8
    $region13: #{tpu_custom_call.1} parent=1 // pred_fallthru
      _
    // Predicated region
    $region14: #{tpu_custom_call.1} parent=1 // pred_check
      _
    $region15: #{tpu_custom_call.1} parent=1 // pred_check_branch
      %52 = sbr.rel (0) target = $region17
    $region16: #{tpu_custom_call.1} parent=1 // pred_region
      %54 = dma.done [#allocation3], 256
    $region17: #{tpu_custom_call.1} parent=1 // pred_fallthru
      _
    // Predicated region
    $region18: #{tpu_custom_call.1} parent=1 // pred_check
      _
    $region19: #{tpu_custom_call.1} parent=1 // pred_check_branch
      %56 = sbr.rel (0) target = $region21
    $region20: #{tpu_custom_call.1} parent=1 // pred_region
      %58 = dma.done [#allocation6], 4096
    $region21: #{tpu_custom_call.1} parent=1 // pred_fallthru
      _
    // Predicated region
    $region22: #{tpu_custom_call.1} parent=1 // pred_check
      _
    $region23: #{tpu_custom_call.1} parent=1 // pred_check_branch
      %60 = sbr.rel (0) target = $region25
    $region24: #{tpu_custom_call.1} parent=1 // pred_region
      %62 = dma.done [#allocation6], 2048
    $region25: #{tpu_custom_call.1} parent=1 // pred_fallthru
      _
    %v63 = vld [vmem:[#allocation2] sm:$0xff]
    %v64 = vld [vmem:[#allocation2 + $0x8] sm:$0xff]
    %v65 = vld [vmem:[#allocation5] sm:$0xff]
    %v66 = vld [vmem:[#allocation5 + $0x8] sm:$0xff]
    %v67 = vld [vmem:[#allocation5 + $0x10] sm:$0xff]
    %v68 = vld [vmem:[#allocation5 + $0x18] sm:$0xff]
    %v69 = vld [vmem:[#allocation5 + $0x20] sm:$0xff]
    %v70 = vld [vmem:[#allocation5 + $0x28] sm:$0xff]
    %v71 = vld [vmem:[#allocation5 + $0x30] sm:$0xff]
    %v72 = vld [vmem:[#allocation5 + $0x38] sm:$0xff]
    %v73 = vld [vmem:[#allocation5 + $0x40] sm:$0xff]
    %v74 = vld [vmem:[#allocation5 + $0x48] sm:$0xff]
    %v75 = vld [vmem:[#allocation5 + $0x50] sm:$0xff]
    %v76 = vld [vmem:[#allocation5 + $0x58] sm:$0xff]
    %v77 = vld [vmem:[#allocation5 + $0x60] sm:$0xff]
    %v78 = vld [vmem:[#allocation5 + $0x68] sm:$0xff]
    %v79 = vld [vmem:[#allocation5 + $0x70] sm:$0xff]
    %v80 = vld [vmem:[#allocation5 + $0x78] sm:$0xff]
    %v81 = vld [vmem:[#allocation5 + $0x80] sm:$0xff]
    %v82 = vld [vmem:[#allocation5 + $0x88] sm:$0xff]
    %v83 = vld [vmem:[#allocation5 + $0x90] sm:$0xff]
    %v84 = vld [vmem:[#allocation5 + $0x98] sm:$0xff]
    %v85 = vld [vmem:[#allocation5 + $0xa0] sm:$0xff]
    %v86 = vld [vmem:[#allocation5 + $0xa8] sm:$0xff]
    %v87 = vld [vmem:[#allocation5 + $0xb0] sm:$0xff]
    %v88 = vld [vmem:[#allocation5 + $0xb8] sm:$0xff]
    %v89 = vld [vmem:[#allocation5 + $0xc0] sm:$0xff]
    %v90 = vld [vmem:[#allocation5 + $0xc8] sm:$0xff]
    %v91 = vld [vmem:[#allocation5 + $0xd0] sm:$0xff]
    %v92 = vld [vmem:[#allocation5 + $0xd8] sm:$0xff]
    %v93 = vld [vmem:[#allocation5 + $0xe0] sm:$0xff]
    %v94 = vld [vmem:[#allocation5 + $0xe8] sm:$0xff]
    %v95 = vld [vmem:[#allocation5 + $0xf0] sm:$0xff]
    %v96 = vld [vmem:[#allocation5 + $0xf8] sm:$0xff]
    %97 = vmatpush.msra.mxu0 %v80
    %98 = vmatpush.msra.mxu0 %v79
    %99 = vmatpush.msra.mxu0 %v78
    %100 = vmatpush.msra.mxu0 %v77
    %101 = vmatpush.msra.mxu0 %v76
    %102 = vmatpush.msra.mxu0 %v75
    %103 = vmatpush.msra.mxu0 %v74
    %104 = vmatpush.msra.mxu0 %v73
    %105 = vmatpush.msra.mxu0 %v72
    %106 = vmatpush.msra.mxu0 %v71
    %107 = vmatpush.msra.mxu0 %v70
    %108 = vmatpush.msra.mxu0 %v69
    %109 = vmatpush.msra.mxu0 %v68
    %110 = vmatpush.msra.mxu0 %v67
    %111 = vmatpush.msra.mxu0 %v66
    %112 = vmatpush.msra.mxu0 %v65
    %113 = vmatmul.f32.gmra.mxu0 %v63
    %v114 = vpop.f32.mrf.mxu0
    %v115 = vadd.f32 0.0, %v114
    %116 = vdwg.mxu0
    %117 = vmatpush.msra.mxu0 %v96
    %118 = vmatpush.msra.mxu0 %v95
    %119 = vmatpush.msra.mxu0 %v94
    %120 = vmatpush.msra.mxu0 %v93
    %121 = vmatpush.msra.mxu0 %v92
    %122 = vmatpush.msra.mxu0 %v91
    %123 = vmatpush.msra.mxu0 %v90
    %124 = vmatpush.msra.mxu0 %v89
    %125 = vmatpush.msra.mxu0 %v88
    %126 = vmatpush.msra.mxu0 %v87
    %127 = vmatpush.msra.mxu0 %v86
    %128 = vmatpush.msra.mxu0 %v85
    %129 = vmatpush.msra.mxu0 %v84
    %130 = vmatpush.msra.mxu0 %v83
    %131 = vmatpush.msra.mxu0 %v82
    %132 = vmatpush.msra.mxu0 %v81
    %133 = vmatmul.f32.gmra.mxu0 %v64
    %v134 = vpop.f32.mrf.mxu0
    %v135 = vadd.f32 %v115, %v134
    %136 = vdwg.mxu0
    %137 = vst [vmem:[#allocation9] sm:$0xff] %v135
    %v138 = vmax.f32 %v135, 0.0
    %v139 = vld [vmem:[#allocation7] sm:$0xff]
    %v140 = vld [vmem:[#allocation7 + $0x8] sm:$0xff]
    %v141 = vld [vmem:[#allocation7 + $0x10] sm:$0xff]
    %v142 = vld [vmem:[#allocation7 + $0x18] sm:$0xff]
    %v143 = vld [vmem:[#allocation7 + $0x20] sm:$0xff]
    %v144 = vld [vmem:[#allocation7 + $0x28] sm:$0xff]
    %v145 = vld [vmem:[#allocation7 + $0x30] sm:$0xff]
    %v146 = vld [vmem:[#allocation7 + $0x38] sm:$0xff]
    %v147 = vld [vmem:[#allocation7 + $0x40] sm:$0xff]
    %v148 = vld [vmem:[#allocation7 + $0x48] sm:$0xff]
    %v149 = vld [vmem:[#allocation7 + $0x50] sm:$0xff]
    %v150 = vld [vmem:[#allocation7 + $0x58] sm:$0xff]
    %v151 = vld [vmem:[#allocation7 + $0x60] sm:$0xff]
    %v152 = vld [vmem:[#allocation7 + $0x68] sm:$0xff]
    %v153 = vld [vmem:[#allocation7 + $0x70] sm:$0xff]
    %v154 = vld [vmem:[#allocation7 + $0x78] sm:$0xff]
    %155 = vmatpush.msra.mxu0 %v154
    %156 = vmatpush.msra.mxu0 %v153
    %157 = vmatpush.msra.mxu0 %v152
    %158 = vmatpush.msra.mxu0 %v151
    %159 = vmatpush.msra.mxu0 %v150
    %160 = vmatpush.msra.mxu0 %v149
    %161 = vmatpush.msra.mxu0 %v148
    %162 = vmatpush.msra.mxu0 %v147
    %163 = vmatpush.msra.mxu0 %v146
    %164 = vmatpush.msra.mxu0 %v145
    %165 = vmatpush.msra.mxu0 %v144
    %166 = vmatpush.msra.mxu0 %v143
    %167 = vmatpush.msra.mxu0 %v142
    %168 = vmatpush.msra.mxu0 %v141
    %169 = vmatpush.msra.mxu0 %v140
    %170 = vmatpush.msra.mxu0 %v139
    %171 = vmatmul.f32.gmra.mxu0 %v138
    %v172 = vpop.f32.mrf.mxu0
    %v173 = vadd.f32 0.0, %v172
    %174 = vdwg.mxu0
    %175 = vst [vmem:[#allocation8] sm:$0xff] %v173
    // Predicated region
    $region26: #{tpu_custom_call.1} parent=1 // pred_check
      _
    $region27: #{tpu_custom_call.1} parent=1 // pred_check_branch
      %177 = sbr.rel (0) target = $region29
    $region28: #{tpu_custom_call.1} parent=1 // pred_region
      %179 = vsyncadd [#allocation4], 0
      %s181 = sshll.u32 [#allocation8], 4
      %s182 = int_to_ptr.vmem [resolvable:$true] %s181
      %s183 = sshll.u32 %s3, 4
      %s184 = int_to_ptr.hbm [resolvable:$true] %s183
      %186 = dma.vmem_to_hbm [thread:$0]  %s182, 128, %s184, [#allocation4]
    $region29: #{tpu_custom_call.1} parent=1 // pred_fallthru
      _
    // Predicated region
    $region30: #{tpu_custom_call.1} parent=1 // pred_check
      _
    $region31: #{tpu_custom_call.1} parent=1 // pred_check_branch
      %188 = sbr.rel (0) target = $region33
    $region32: #{tpu_custom_call.1} parent=1 // pred_region
      %190 = vsyncadd [#allocation10], 0
      %s192 = sshll.u32 [#allocation9], 4
      %s193 = int_to_ptr.vmem [resolvable:$true] %s192
      %s194 = sshll.u32 %s4, 4
      %s195 = int_to_ptr.hbm [resolvable:$true] %s194
      %197 = dma.vmem_to_hbm [thread:$0]  %s193, 128, %s195, [#allocation10]
    $region33: #{tpu_custom_call.1} parent=1 // pred_fallthru
      _
    // Predicated region
    $region34: #{tpu_custom_call.1} parent=1 // pred_check
      _
    $region35: #{tpu_custom_call.1} parent=1 // pred_check_branch
      %199 = sbr.rel (0) target = $region37
    $region36: #{tpu_custom_call.1} parent=1 // pred_region
      %201 = dma.done [#allocation4], 128
    $region37: #{tpu_custom_call.1} parent=1 // pred_fallthru
      _
    // Predicated region
    $region38: #{tpu_custom_call.1} parent=1 // pred_check
      _
    $region39: #{tpu_custom_call.1} parent=1 // pred_check_branch
      %203 = sbr.rel (0) target = $region41
    $region40: #{tpu_custom_call.1} parent=1 // pred_region
      %205 = dma.done [#allocation10], 128
    $region41: #{tpu_custom_call.1} parent=1 // pred_fallthru
      _
    %206 = vsyncpa [#allocation3], 1
    %207 = vsyncpa [#allocation6], 1
    %208 = vsyncpa [#allocation4], 1
    %209 = vsyncpa [#allocation10], 1

// kernel: tpu_custom_call.1
$region0: #{tpu_custom_call.1}
  #allocation0 [shape = 'u32[]', space=smem, size = 0x4, offset = 0x4, fixed_abs, tag = 'smem constant byte address 0x4 - core index']
  #allocation1 [shape = 'u32[72,128]{1,0:T(1,128)}', space=vmem, size = 0x9000, scoped, tag = 'internal scratch']
  %s0 = inlined_call_operand.hbm [shape: f32[8,256], index: 0, kind: input, shape index: {}]
  %s1 = inlined_call_operand.hbm [shape: f32[256,128], index: 1, kind: input, shape index: {}]
  %s2 = inlined_call_operand.hbm [shape: f32[128,128], index: 2, kind: input, shape index: {}]
  %s3 = inlined_call_operand.hbm [shape: f32[8,128], index: 3, kind: output, shape index: {0}]
  %s4 = inlined_call_operand.hbm [shape: f32[8,128], index: 4, kind: output, shape index: {1}]
  %5 = xla_tuple %s3, %s4
  %s6 = sld [smem:[#allocation0]]
  $region42: #{tpu_custom_call.1} parent=0
    _
  %s8 = ssub.s32 1, %s6
  %s9 = scalar_select 0, %s8, %s6
  $region1: #{tpu_custom_call.1} parent=0
    #allocation2 [shape = 'u8[8192]{0}', space=vmem, size = 0x2000, scoped, tag = 'input window, operand 0, single buffered']
    #allocation3 [shape = 's32[1]{0}', space=sflag, size = 0x4, scoped, tag = 'scoped memory for tpu_custom_call.1']
    #allocation4 [shape = 's32[1]{0}', space=sflag, size = 0x4, scoped, tag = 'scoped memory for tpu_custom_call.1']
    #allocation5 [shape = 'u8[131072]{0}', space=vmem, size = 0x20000, scoped, tag = 'input window, operand 1, single buffered']
    #allocation6 [shape = 's32[1]{0}', space=sflag, size = 0x4, scoped, tag = 'scoped memory for tpu_custom_call.1']
    #allocation7 [shape = 'u8[65536]{0}', space=vmem, size = 0x10000, scoped, tag = 'input window, operand 2, single buffered']
    #allocation8 [shape = 'u8[4096]{0}', space=vmem, size = 0x1000, scoped, tag = 'output window, operand 0, single buffered']
    #allocation9 [shape = 'u8[4096]{0}', space=vmem, size = 0x1000, scoped, tag = 'output window, operand 1, single buffered']
    #allocation10 [shape = 's32[1]{0}', space=sflag, size = 0x4, scoped, tag = 'scoped memory for tpu_custom_call.1']
    %10 = vsyncpa [#allocation3], 0
    %11 = vsyncpa [#allocation6], 0
    %12 = vsyncpa [#allocation4], 0
    %13 = vsyncpa [#allocation10], 0
    // Predicated region
    $region2: #{tpu_custom_call.1} parent=1 // pred_check
      _
    $region3: #{tpu_custom_call.1} parent=1 // pred_check_branch
      %15 = sbr.rel (0) target = $region5
    $region4: #{tpu_custom_call.1} parent=1 // pred_region
      %17 = vsyncadd [#allocation3], 0
      %s19 = sshll.u32 %s0, 4
      %s20 = int_to_ptr.hbm [resolvable:$true] %s19
      %s21 = sshll.u32 [#allocation2], 4
      %s22 = int_to_ptr.vmem [resolvable:$true] %s21
      %24 = dma.hbm_to_vmem [thread:$0]  %s20, 256, %s22, [#allocation3]
    $region5: #{tpu_custom_call.1} parent=1 // pred_fallthru
      _
    // Predicated region
    $region6: #{tpu_custom_call.1} parent=1 // pred_check
      _
    $region7: #{tpu_custom_call.1} parent=1 // pred_check_branch
      %26 = sbr.rel (0) target = $region9
    $region8: #{tpu_custom_call.1} parent=1 // pred_region
      %28 = vsyncadd [#allocation6], 0
      %s29 = sshll.u32 %s1, 4
      %s30 = int_to_ptr.hbm [resolvable:$true] %s29
      %s31 = sshll.u32 [#allocation5], 4
      %s32 = int_to_ptr.vmem [resolvable:$true] %s31
      %37 = dma.hbm_to_vmem [thread:$0]  %s30, 4096, %s32, [#allocation6], 128, 128, 8
    $region9: #{tpu_custom_call.1} parent=1 // pred_fallthru
      _
    // Predicated region
    $region10: #{tpu_custom_call.1} parent=1 // pred_check
      _
    $region11: #{tpu_custom_call.1} parent=1 // pred_check_branch
      %39 = sbr.rel (0) target = $region13
    $region12: #{tpu_custom_call.1} parent=1 // pred_region
      %41 = vsyncadd [#allocation6], 0
      %s42 = sshll.u32 %s2, 4
      %s43 = int_to_ptr.hbm [resolvable:$true] %s42
      %s44 = sshll.u32 [#allocation7], 4
      %s45 = int_to_ptr.vmem [resolvable:$true] %s44
      %50 = dma.hbm_to_vmem [thread:$0]  %s43, 2048, %s45, [#allocation6], 128, 128, 8
    $region13: #{tpu_custom_call.1} parent=1 // pred_fallthru
      _
    // Predicated region
    $region14: #{tpu_custom_call.1} parent=1 // pred_check
      _
    $region15: #{tpu_custom_call.1} parent=1 // pred_check_branch
      %52 = sbr.rel (0) target = $region17
    $region16: #{tpu_custom_call.1} parent=1 // pred_region
      %54 = dma.done [#allocation3], 256
    $region17: #{tpu_custom_call.1} parent=1 // pred_fallthru
      _
    // Predicated region
    $region18: #{tpu_custom_call.1} parent=1 // pred_check
      _
    $region19: #{tpu_custom_call.1} parent=1 // pred_check_branch
      %56 = sbr.rel (0) target = $region21
    $region20: #{tpu_custom_call.1} parent=1 // pred_region
      %58 = dma.done [#allocation6], 4096
    $region21: #{tpu_custom_call.1} parent=1 // pred_fallthru
      _
    // Predicated region
    $region22: #{tpu_custom_call.1} parent=1 // pred_check
      _
    $region23: #{tpu_custom_call.1} parent=1 // pred_check_branch
      %60 = sbr.rel (0) target = $region25
    $region24: #{tpu_custom_call.1} parent=1 // pred_region
      %62 = dma.done [#allocation6], 2048
    $region25: #{tpu_custom_call.1} parent=1 // pred_fallthru
      _
    %v63 = vld [vmem:[#allocation2] sm:$0xff]
    %v64 = vld [vmem:[#allocation2 + $0x8] sm:$0xff]
    %v65 = vld [vmem:[#allocation5] sm:$0xff]
    %v66 = vld [vmem:[#allocation5 + $0x8] sm:$0xff]
    %v67 = vld [vmem:[#allocation5 + $0x10] sm:$0xff]
    %v68 = vld [vmem:[#allocation5 + $0x18] sm:$0xff]
    %v69 = vld [vmem:[#allocation5 + $0x20] sm:$0xff]
    %v70 = vld [vmem:[#allocation5 + $0x28] sm:$0xff]
    %v71 = vld [vmem:[#allocation5 + $0x30] sm:$0xff]
    %v72 = vld [vmem:[#allocation5 + $0x38] sm:$0xff]
    %v73 = vld [vmem:[#allocation5 + $0x40] sm:$0xff]
    %v74 = vld [vmem:[#allocation5 + $0x48] sm:$0xff]
    %v75 = vld [vmem:[#allocation5 + $0x50] sm:$0xff]
    %v76 = vld [vmem:[#allocation5 + $0x58] sm:$0xff]
    %v77 = vld [vmem:[#allocation5 + $0x60] sm:$0xff]
    %v78 = vld [vmem:[#allocation5 + $0x68] sm:$0xff]
    %v79 = vld [vmem:[#allocation5 + $0x70] sm:$0xff]
    %v80 = vld [vmem:[#allocation5 + $0x78] sm:$0xff]
    %v81 = vld [vmem:[#allocation5 + $0x80] sm:$0xff]
    %v82 = vld [vmem:[#allocation5 + $0x88] sm:$0xff]
    %v83 = vld [vmem:[#allocation5 + $0x90] sm:$0xff]
    %v84 = vld [vmem:[#allocation5 + $0x98] sm:$0xff]
    %v85 = vld [vmem:[#allocation5 + $0xa0] sm:$0xff]
    %v86 = vld [vmem:[#allocation5 + $0xa8] sm:$0xff]
    %v87 = vld [vmem:[#allocation5 + $0xb0] sm:$0xff]
    %v88 = vld [vmem:[#allocation5 + $0xb8] sm:$0xff]
    %v89 = vld [vmem:[#allocation5 + $0xc0] sm:$0xff]
    %v90 = vld [vmem:[#allocation5 + $0xc8] sm:$0xff]
    %v91 = vld [vmem:[#allocation5 + $0xd0] sm:$0xff]
    %v92 = vld [vmem:[#allocation5 + $0xd8] sm:$0xff]
    %v93 = vld [vmem:[#allocation5 + $0xe0] sm:$0xff]
    %v94 = vld [vmem:[#allocation5 + $0xe8] sm:$0xff]
    %v95 = vld [vmem:[#allocation5 + $0xf0] sm:$0xff]
    %v96 = vld [vmem:[#allocation5 + $0xf8] sm:$0xff]
    %97 = vmatpush.msra.mxu0 %v80
    %98 = vmatpush.msra.mxu0 %v79
    %99 = vmatpush.msra.mxu0 %v78
    %100 = vmatpush.msra.mxu0 %v77
    %101 = vmatpush.msra.mxu0 %v76
    %102 = vmatpush.msra.mxu0 %v75
    %103 = vmatpush.msra.mxu0 %v74
    %104 = vmatpush.msra.mxu0 %v73
    %105 = vmatpush.msra.mxu0 %v72
    %106 = vmatpush.msra.mxu0 %v71
    %107 = vmatpush.msra.mxu0 %v70
    %108 = vmatpush.msra.mxu0 %v69
    %109 = vmatpush.msra.mxu0 %v68
    %110 = vmatpush.msra.mxu0 %v67
    %111 = vmatpush.msra.mxu0 %v66
    %112 = vmatpush.msra.mxu0 %v65
    %113 = vmatmul.f32.gmra.mxu0 %v63
    %v114 = vpop.f32.mrf.mxu0
    %v115 = vadd.f32 0.0, %v114
    %116 = vdwg.mxu0
    %117 = vmatpush.msra.mxu0 %v96
    %118 = vmatpush.msra.mxu0 %v95
    %119 = vmatpush.msra.mxu0 %v94
    %120 = vmatpush.msra.mxu0 %v93
    %121 = vmatpush.msra.mxu0 %v92
    %122 = vmatpush.msra.mxu0 %v91
    %123 = vmatpush.msra.mxu0 %v90
    %124 = vmatpush.msra.mxu0 %v89
    %125 = vmatpush.msra.mxu0 %v88
    %126 = vmatpush.msra.mxu0 %v87
    %127 = vmatpush.msra.mxu0 %v86
    %128 = vmatpush.msra.mxu0 %v85
    %129 = vmatpush.msra.mxu0 %v84
    %130 = vmatpush.msra.mxu0 %v83
    %131 = vmatpush.msra.mxu0 %v82
    %132 = vmatpush.msra.mxu0 %v81
    %133 = vmatmul.f32.gmra.mxu0 %v64
    %v134 = vpop.f32.mrf.mxu0
    %v135 = vadd.f32 %v115, %v134
    %136 = vdwg.mxu0
    %137 = vst [vmem:[#allocation9] sm:$0xff] %v135
    %v138 = vmax.f32 %v135, 0.0
    %v139 = vld [vmem:[#allocation7] sm:$0xff]
    %v140 = vld [vmem:[#allocation7 + $0x8] sm:$0xff]
    %v141 = vld [vmem:[#allocation7 + $0x10] sm:$0xff]
    %v142 = vld [vmem:[#allocation7 + $0x18] sm:$0xff]
    %v143 = vld [vmem:[#allocation7 + $0x20] sm:$0xff]
    %v144 = vld [vmem:[#allocation7 + $0x28] sm:$0xff]
    %v145 = vld [vmem:[#allocation7 + $0x30] sm:$0xff]
    %v146 = vld [vmem:[#allocation7 + $0x38] sm:$0xff]
    %v147 = vld [vmem:[#allocation7 + $0x40] sm:$0xff]
    %v148 = vld [vmem:[#allocation7 + $0x48] sm:$0xff]
    %v149 = vld [vmem:[#allocation7 + $0x50] sm:$0xff]
    %v150 = vld [vmem:[#allocation7 + $0x58] sm:$0xff]
    %v151 = vld [vmem:[#allocation7 + $0x60] sm:$0xff]
    %v152 = vld [vmem:[#allocation7 + $0x68] sm:$0xff]
    %v153 = vld [vmem:[#allocation7 + $0x70] sm:$0xff]
    %v154 = vld [vmem:[#allocation7 + $0x78] sm:$0xff]
    %155 = vmatpush.msra.mxu0 %v154
    %156 = vmatpush.msra.mxu0 %v153
    %157 = vmatpush.msra.mxu0 %v152
    %158 = vmatpush.msra.mxu0 %v151
    %159 = vmatpush.msra.mxu0 %v150
    %160 = vmatpush.msra.mxu0 %v149
    %161 = vmatpush.msra.mxu0 %v148
    %162 = vmatpush.msra.mxu0 %v147
    %163 = vmatpush.msra.mxu0 %v146
    %164 = vmatpush.msra.mxu0 %v145
    %165 = vmatpush.msra.mxu0 %v144
    %166 = vmatpush.msra.mxu0 %v143
    %167 = vmatpush.msra.mxu0 %v142
    %168 = vmatpush.msra.mxu0 %v141
    %169 = vmatpush.msra.mxu0 %v140
    %170 = vmatpush.msra.mxu0 %v139
    %171 = vmatmul.f32.gmra.mxu0 %v138
    %v172 = vpop.f32.mrf.mxu0
    %v173 = vadd.f32 0.0, %v172
    %174 = vdwg.mxu0
    %175 = vst [vmem:[#allocation8] sm:$0xff] %v173
    // Predicated region
    $region26: #{tpu_custom_call.1} parent=1 // pred_check
      _
    $region27: #{tpu_custom_call.1} parent=1 // pred_check_branch
      %177 = sbr.rel (0) target = $region29
    $region28: #{tpu_custom_call.1} parent=1 // pred_region
      %179 = vsyncadd [#allocation4], 0
      %s181 = sshll.u32 [#allocation8], 4
      %s182 = int_to_ptr.vmem [resolvable:$true] %s181
      %s183 = sshll.u32 %s3, 4
      %s184 = int_to_ptr.hbm [resolvable:$true] %s183
      %186 = dma.vmem_to_hbm [thread:$0]  %s182, 128, %s184, [#allocation4]
    $region29: #{tpu_custom_call.1} parent=1 // pred_fallthru
      _
    // Predicated region
    $region30: #{tpu_custom_call.1} parent=1 // pred_check
      _
    $region31: #{tpu_custom_call.1} parent=1 // pred_check_branch
      %188 = sbr.rel (0) target = $region33
    $region32: #{tpu_custom_call.1} parent=1 // pred_region
      %190 = vsyncadd [#allocation10], 0
      %s192 = sshll.u32 [#allocation9], 4
      %s193 = int_to_ptr.vmem [resolvable:$true] %s192
      %s194 = sshll.u32 %s4, 4
      %s195 = int_to_ptr.hbm [resolvable:$true] %s194
      %197 = dma.vmem_to_hbm [thread:$0]  %s193, 128, %s195, [#allocation10]
    $region33: #{tpu_custom_call.1} parent=1 // pred_fallthru
      _
    // Predicated region
    $region34: #{tpu_custom_call.1} parent=1 // pred_check
      _
    $region35: #{tpu_custom_call.1} parent=1 // pred_check_branch
      %199 = sbr.rel (0) target = $region37
    $region36: #{tpu_custom_call.1} parent=1 // pred_region
      %201 = dma.done [#allocation4], 128
    $region37: #{tpu_custom_call.1} parent=1 // pred_fallthru
      _
    // Predicated region
    $region38: #{tpu_custom_call.1} parent=1 // pred_check
      _
    $region39: #{tpu_custom_call.1} parent=1 // pred_check_branch
      %203 = sbr.rel (0) target = $region41
    $region40: #{tpu_custom_call.1} parent=1 // pred_region
      %205 = dma.done [#allocation10], 128
    $region41: #{tpu_custom_call.1} parent=1 // pred_fallthru
      _
    %206 = vsyncpa [#allocation3], 1
    %207 = vsyncpa [#allocation6], 1
    %208 = vsyncpa [#allocation4], 1
    %209 = vsyncpa [#allocation10], 1

</llo_original>
